<compile_context>
chip_gen: v7x
topology: tpu7x:2x2x1
jax: 0.10.0
libtpu: 0.0.40
codegen_flags: <defaults>
</compile_context>

<pallas_src>
import math

import jax
import jax.numpy as jnp
from jax import lax
from jax.experimental import pallas as pl
from jax.experimental.pallas import tpu as pltpu


_LANES = 512            # lane-dense slab width (multiple of 128)
_MIN_TILE_ROWS = 16     # keeps the half-tile split sublane (8) aligned
_MAX_TILE_BYTES = 2 * 1024 * 1024   # <= 2 MiB per output block
_TARGET_BLOCKS = 4      # >= 2 blocks so both v7x TensorCores are used


def _round_up(x: int, m: int) -> int:
    return (x + m - 1) // m * m


def _mix32(x):
    """lowbias32 / murmur-style 32-bit finalizer (plain VPU integer ops)."""
    x = x ^ (x >> 16)
    x = x * jnp.uint32(0x7FEB352D)
    x = x ^ (x >> 15)
    x = x * jnp.uint32(0x846CA68B)
    x = x ^ (x >> 16)
    return x


def _randn_kernel(seed_ref, out_ref):
    """Fill one (tile_rows, lanes) block with i.i.d. standard normals.

    One 32-bit hash produces TWO normals (top half / bottom half of the block):
    Box-Muller with a single cos(); the second variate uses a random sign times
    sqrt(1 - c*c) instead of sin().  log/sqrt go to the EUP; the uniforms are
    built with exponent-bit tricks so there are no int->float converts.
    """
    tile_rows, lanes = out_ref.shape
    half_rows = tile_rows // 2
    lane_shift = int(math.ceil(math.log2(lanes)))   # static Python int

    blk = pl.program_id(0)
    seed = seed_ref[0].astype(jnp.uint32)
    key = (seed + jnp.uint32(1)) * jnp.uint32(0x9E3779B9)
    # Scalar per-block counter base -> disjoint counter ranges across blocks.
    base = blk.astype(jnp.uint32) * jnp.uint32(half_rows << lane_shift) + key

    row = lax.broadcasted_iota(jnp.int32, (half_rows, lanes), 0)
    col = lax.broadcasted_iota(jnp.int32, (half_rows, lanes), 1)
    counter = ((row << lane_shift) | col).astype(jnp.uint32)   # unique in block

    bits = _mix32(counter + base)                              # one hash / pair

    one_bits = jnp.uint32(0x3F800000)                          # bit pattern of 1.0f
    # u1 in (0, 1] (log-safe): high 16 bits -> mantissa of [1, 2), then 2 - f.
    f1 = pltpu.bitcast(((bits >> 16) << 7) | one_bits, jnp.float32)
    u1 = jnp.float32(2.0) - f1
    # u2 in [0, 1): bits 1..15 -> mantissa of [1, 2), then f - 1.
    f2 = pltpu.bitcast(((bits & jnp.uint32(0xFFFE)) << 7) | one_bits, jnp.float32)
    u2 = f2 - jnp.float32(1.0)
    # Random +-1.0 from bit 0 (sign of the second variate).
    s = pltpu.bitcast(((bits & jnp.uint32(1)) << 31) | one_bits, jnp.float32)

    r = jnp.sqrt(jnp.float32(-2.0) * jnp.log(u1))
    c = jnp.cos(jnp.float32(2.0 * math.pi) * u2)
    sin_mag = jnp.sqrt(jnp.maximum(jnp.float32(1.0) - c * c, jnp.float32(0.0)))

    out_ref[:half_rows, :] = r * c
    out_ref[half_rows:, :] = (r * s) * sin_mag


def _placeholder_randn(batch: int, d_model: int, seed: int) -> jax.Array:
    """Pallas-generated equivalent of torch.randn(batch, 200, d_model)."""
    total = batch * 200 * d_model

    # Lane-dense slab.  If d_model is already a multiple of 128, write straight
    # into (batch*200, d_model) (final reshape is free); otherwise use a
    # 512-wide flat slab and reshape in the wrapper.
    if d_model % 128 == 0:
        lanes, rows = d_model, batch * 200
    else:
        lanes, rows = _LANES, pl.cdiv(total, _LANES)
    padded = rows * lanes != total   # extra wrapper slice only in this case

    max_tile_rows = max(
        _MIN_TILE_ROWS,
        (_MAX_TILE_BYTES // (lanes * 4)) // _MIN_TILE_ROWS * _MIN_TILE_ROWS,
    )
    # Aim for >= _TARGET_BLOCKS grid steps (megacore sharding on v7x) while
    # keeping every block a multiple of 16 rows; Pallas clips the last block.
    tile_rows = max(
        _MIN_TILE_ROWS,
        min(max_tile_rows, _round_up(pl.cdiv(rows, _TARGET_BLOCKS), _MIN_TILE_ROWS)),
    )
    grid = (pl.cdiv(rows, tile_rows),)

    seed_arr = jnp.asarray([seed], dtype=jnp.int32)

    slab = pl.pallas_call(
        _randn_kernel,
        out_shape=jax.ShapeDtypeStruct((rows, lanes), jnp.float32),
        grid_spec=pltpu.PrefetchScalarGridSpec(
            num_scalar_prefetch=1,
            grid=grid,
            in_specs=[],
            out_specs=pl.BlockSpec((tile_rows, lanes), lambda i, seed: (i, 0)),
        ),
        compiler_params=pltpu.CompilerParams(
            dimension_semantics=("parallel",),
            vmem_limit_bytes=32 * 1024 * 1024,
        ),
    )(seed_arr)

    if padded:
        return slab.reshape(-1)[:total].reshape(batch, 200, d_model)
    return slab.reshape(batch, 200, d_model)


# ----------------------------------------------------------------------------
# AudioEncoder wrapper (mirrors the PyTorch module).
# ----------------------------------------------------------------------------
class AudioEncoder:
    def __init__(self, audio_config, key):
        self.config = dict(audio_config)
        d_model = self.config["d_model"]

        # Parameters materialized to match the PyTorch __init__ shapes; they are
        # NOT used by the placeholder forward pass (exactly as in PyTorch).
        # TODO(synk): wire these into a real feature-extractor kernel once the
        # reference forward stops returning a dummy randn tensor.
        k_conv_w, k_conv_b = jax.random.split(key, 2)
        fan_in = 1 * 10  # Conv1d(1, 512, kernel_size=10, stride=5)
        bound = 1.0 / math.sqrt(fan_in)
        self.conv_weight = jax.random.uniform(
            k_conv_w, (512, 1, 10), jnp.float32, minval=-bound, maxval=bound
        )
        self.conv_bias = jax.random.uniform(
            k_conv_b, (512,), jnp.float32, minval=-bound, maxval=bound
        )
        self.num_blocks = self.config["layers"]  # nn.Identity blocks: no params
        self.ln_weight = jnp.ones((d_model,), jnp.float32)
        self.ln_bias = jnp.zeros((d_model,), jnp.float32)

        print(f"Placeholder Audio Encoder Initialized: {d_model} dim")

    def forward(self, audio_waveforms, seed: int = 0):
        print("Warning: Using placeholder for AudioEncoder forward pass")
        batch = audio_waveforms.shape[0]
        return _placeholder_randn(batch, self.config["d_model"], seed)

    __call__ = forward


if __name__ == "__main__":
    key = jax.random.PRNGKey(0)
    k_params, k_input = jax.random.split(key)

    audio_config = {"d_model": 32, "layers": 2}
    encoder = AudioEncoder(audio_config, k_params)

    # Small synthetic waveform input: (batch, samples).
    audio_waveforms = jax.random.normal(k_input, (2, 160), jnp.float32)

    out = encoder(audio_waveforms, seed=0)
    out = jax.block_until_ready(out)

    assert out.shape == (2, 200, audio_config["d_model"])
    assert out.dtype == jnp.float32
    assert bool(jnp.all(jnp.isfinite(out)))
    # Sanity: distribution is roughly standard normal.
    assert abs(float(jnp.mean(out))) < 0.1
    assert 0.8 < float(jnp.std(out)) < 1.2

    print("KERNEL_OK")
</pallas_src>

<mosaic_0001>
module attributes {stable_mosaic.version = 11 : i64} {
  func.func @_randn_kernel(%arg0: i32, %arg1: memref<1xi32, #tpu.memory_space<smem>>, %arg2: memref<16x512xf32, #tpu.memory_space<vmem>>) attributes {dimension_semantics = [#tpu.dimension_semantics<parallel>], iteration_bounds = array<i64: 2>, scalar_prefetch = 1 : i64, scratch_operands = 0 : i64, tpu.core_type = #tpu.core_type<tc>, window_params = [{transform_indices = @transform_0, window_bounds = array<i64: 16, 512>}]} {
    %c0 = arith.constant 0 : index
    %0 = memref.load %arg1[%c0] : memref<1xi32, #tpu.memory_space<smem>>
    %c1_i32 = arith.constant 1 : i32
    %1 = arith.addi %0, %c1_i32 : i32
    %c-1640531527_i32 = arith.constant -1640531527 : i32
    %2 = arith.muli %1, %c-1640531527_i32 : i32
    %c4096_i32 = arith.constant 4096 : i32
    %3 = arith.muli %arg0, %c4096_i32 : i32
    %4 = arith.addi %3, %2 : i32
    %5 = tpu.iota {dimensions = array<i32: 0>} : vector<8x512xi32>
    %6 = tpu.iota {dimensions = array<i32: 1>} : vector<8x512xi32>
    %c9_i32 = arith.constant 9 : i32
    %7 = vector.broadcast %c9_i32 : i32 to vector<8x512xi32>
    %8 = arith.shli %5, %7 : vector<8x512xi32>
    %9 = arith.ori %8, %6 : vector<8x512xi32>
    %10 = vector.broadcast %4 : i32 to vector<8x512xi32>
    %11 = arith.addi %9, %10 : vector<8x512xi32>
    %c16_i32 = arith.constant 16 : i32
    %12 = vector.broadcast %c16_i32 : i32 to vector<8x512xi32>
    %13 = arith.shrui %11, %12 : vector<8x512xi32>
    %14 = arith.xori %11, %13 : vector<8x512xi32>
    %c2146121005_i32 = arith.constant 2146121005 : i32
    %15 = vector.broadcast %c2146121005_i32 : i32 to vector<8x512xi32>
    %16 = arith.muli %14, %15 : vector<8x512xi32>
    %c15_i32 = arith.constant 15 : i32
    %17 = vector.broadcast %c15_i32 : i32 to vector<8x512xi32>
    %18 = arith.shrui %16, %17 : vector<8x512xi32>
    %19 = arith.xori %16, %18 : vector<8x512xi32>
    %c-2073254261_i32 = arith.constant -2073254261 : i32
    %20 = vector.broadcast %c-2073254261_i32 : i32 to vector<8x512xi32>
    %21 = arith.muli %19, %20 : vector<8x512xi32>
    %c16_i32_0 = arith.constant 16 : i32
    %22 = vector.broadcast %c16_i32_0 : i32 to vector<8x512xi32>
    %23 = arith.shrui %21, %22 : vector<8x512xi32>
    %24 = arith.xori %21, %23 : vector<8x512xi32>
    %c16_i32_1 = arith.constant 16 : i32
    %25 = vector.broadcast %c16_i32_1 : i32 to vector<8x512xi32>
    %26 = arith.shrui %24, %25 : vector<8x512xi32>
    %c7_i32 = arith.constant 7 : i32
    %27 = vector.broadcast %c7_i32 : i32 to vector<8x512xi32>
    %28 = arith.shli %26, %27 : vector<8x512xi32>
    %c1065353216_i32 = arith.constant 1065353216 : i32
    %29 = vector.broadcast %c1065353216_i32 : i32 to vector<8x512xi32>
    %30 = arith.ori %28, %29 : vector<8x512xi32>
    %31 = tpu.bitcast %30 : vector<8x512xi32> -> vector<8x512xf32>
    %cst = arith.constant 2.000000e+00 : f32
    %32 = vector.broadcast %cst : f32 to vector<8x512xf32>
    %33 = arith.subf %32, %31 : vector<8x512xf32>
    %c65534_i32 = arith.constant 65534 : i32
    %34 = vector.broadcast %c65534_i32 : i32 to vector<8x512xi32>
    %35 = arith.andi %24, %34 : vector<8x512xi32>
    %c7_i32_2 = arith.constant 7 : i32
    %36 = vector.broadcast %c7_i32_2 : i32 to vector<8x512xi32>
    %37 = arith.shli %35, %36 : vector<8x512xi32>
    %c1065353216_i32_3 = arith.constant 1065353216 : i32
    %38 = vector.broadcast %c1065353216_i32_3 : i32 to vector<8x512xi32>
    %39 = arith.ori %37, %38 : vector<8x512xi32>
    %40 = tpu.bitcast %39 : vector<8x512xi32> -> vector<8x512xf32>
    %cst_4 = arith.constant 1.000000e+00 : f32
    %41 = vector.broadcast %cst_4 : f32 to vector<8x512xf32>
    %42 = arith.subf %40, %41 : vector<8x512xf32>
    %c1_i32_5 = arith.constant 1 : i32
    %43 = vector.broadcast %c1_i32_5 : i32 to vector<8x512xi32>
    %44 = arith.andi %24, %43 : vector<8x512xi32>
    %c31_i32 = arith.constant 31 : i32
    %45 = vector.broadcast %c31_i32 : i32 to vector<8x512xi32>
    %46 = arith.shli %44, %45 : vector<8x512xi32>
    %c1065353216_i32_6 = arith.constant 1065353216 : i32
    %47 = vector.broadcast %c1065353216_i32_6 : i32 to vector<8x512xi32>
    %48 = arith.ori %46, %47 : vector<8x512xi32>
    %49 = tpu.bitcast %48 : vector<8x512xi32> -> vector<8x512xf32>
    %50 = math.log %33 : vector<8x512xf32>
    %cst_7 = arith.constant -2.000000e+00 : f32
    %51 = vector.broadcast %cst_7 : f32 to vector<8x512xf32>
    %52 = arith.mulf %51, %50 : vector<8x512xf32>
    %53 = math.sqrt %52 : vector<8x512xf32>
    %cst_8 = arith.constant 6.28318548 : f32
    %54 = vector.broadcast %cst_8 : f32 to vector<8x512xf32>
    %55 = arith.mulf %54, %42 : vector<8x512xf32>
    %56 = math.cos %55 : vector<8x512xf32>
    %57 = arith.mulf %56, %56 : vector<8x512xf32>
    %cst_9 = arith.constant 1.000000e+00 : f32
    %58 = vector.broadcast %cst_9 : f32 to vector<8x512xf32>
    %59 = arith.subf %58, %57 : vector<8x512xf32>
    %cst_10 = arith.constant 0.000000e+00 : f32
    %60 = vector.broadcast %cst_10 : f32 to vector<8x512xf32>
    %61 = arith.maximumf %59, %60 : vector<8x512xf32>
    %62 = math.sqrt %61 : vector<8x512xf32>
    %63 = arith.mulf %53, %56 : vector<8x512xf32>
    %c0_11 = arith.constant 0 : index
    %c0_12 = arith.constant 0 : index
    %64 = vector.load %arg2[%c0_11, %c0_12] : memref<16x512xf32, #tpu.memory_space<vmem>>, vector<8x512xf32>
    tpu.vector_store %arg2[%c0_11, %c0_12], %63 {strides = array<i32>} : memref<16x512xf32, #tpu.memory_space<vmem>>, vector<8x512xf32>,
    %65 = arith.mulf %53, %49 : vector<8x512xf32>
    %66 = arith.mulf %65, %62 : vector<8x512xf32>
    %c8 = arith.constant 8 : index
    %c0_13 = arith.constant 0 : index
    %67 = vector.load %arg2[%c8, %c0_13] : memref<16x512xf32, #tpu.memory_space<vmem>>, vector<8x512xf32>
    tpu.vector_store %arg2[%c8, %c0_13], %66 {strides = array<i32>} : memref<16x512xf32, #tpu.memory_space<vmem>>, vector<8x512xf32>,
    return
  }
  func.func @transform_0(%arg0: i32, %arg1: memref<1xi32, #tpu.memory_space<smem>>) -> (i32, i32) {
    %c0_i32 = arith.constant 0 : i32
    %c0_i32_0 = arith.constant 0 : i32
    return %arg0, %c0_i32 : i32, i32
  }
}

</mosaic_0001>

<llo_original>
// kernel: tpu_custom_call.1
$region0: #{tpu_custom_call.1}
  #allocation0 [shape = 'u32[]', space=smem, size = 0x4, offset = 0x4, fixed_abs, tag = 'smem constant byte address 0x4 - core index']
  #allocation1 [shape = 'u32[144,128]{1,0:T(1,128)}', space=vmem, size = 0x12000, scoped, tag = 'internal scratch']
  #allocation2 [shape = 's32[1]{0}', space=sflag, size = 0x4, scoped, tag = 'scoped memory for tpu_custom_call.1']
  #allocation3 [shape = 's32[1]{0:T(128)S(6)}', space=smem, size = 0x200, scoped, tag = 'prefetched SMEM operand 0']
  %s0 = inlined_call_operand.<no memory space> [shape: s32[1], index: 0, kind: input, shape index: {}]
  %s1 = inlined_call_operand.hbm [shape: f32[25,512], index: 1, kind: output, shape index: {}]
  %s2 = sld [smem:[#allocation0]]
  $region25: #{tpu_custom_call.1} parent=0
    _
  %s4 = ssub.s32 1, %s2
  %s5 = scalar_select 0, %s4, %s2
  %6 = sst [smem:[#allocation3]] %s0
  $region1: #{tpu_custom_call.1} parent=0
    #allocation4 [shape = 'u8[65536]{0}', space=vmem, size = 0x10000, scoped, tag = 'output window, operand 0']
    #allocation5 [shape = 's32[2]{0}', space=sflag, size = 0x8, scoped, tag = 'scoped memory for tpu_custom_call.1']
    %7 = vsyncpa [#allocation5], 0
    %s8 = scalar_lea.sflag [#allocation5], 1
    %9 = vsyncpa %s8, 0
    loop: start=0, step=1, limit=3
    $region2: #{tpu_custom_call.1} parent=1 // loop_pre_header
      _
    $region3: #{tpu_custom_call.1} parent=1 // loop_header
      %s11 = sphi 0, %s15
      %p12 = scmp.ge.s32.totalorder %s11, 3
      %s20 = sphi 0, %s22
      %s23 = sphi 0, %s20
      %s33 = sphi 0, %s23
    $region4: #{tpu_custom_call.1} parent=1 // loop_header_branch
      %14 = sbr.rel (%p12) target = $region8
    $region5: #{tpu_custom_call.1} parent=1 // loop_body
      %s16 = ssub.s32 %s11, 1
      %s17 = sadd.s32 %s11, 1
      %s18 = ssub.s32 %s11, %s17
      %p19 = scmp.eq.s32.totalorder %s18, 0
      %s21 = sadd.s32 %s20, 1
      %s22 = scalar_select %p19, %s20, %s21
      %p24 = pneg %p19
      %p25 = scmp.eq.s32.totalorder %s11, 1
      %p26 = por %p24, %p25
      %p27 = scmp.ne.s32.totalorder %s20, %s23
      %p28 = scmp.eq.s32.totalorder %s11, 0
      %p29 = por %p27, %p28
      %p30 = scmp.ne.s32.totalorder %s20, %s23
      %p31 = scmp.eq.s32.totalorder %s16, 1
      %p32 = por %p30, %p31
      %p34 = scmp.ne.s32.totalorder %s23, %s33
      %p35 = scmp.eq.s32.totalorder %s16, 0
      %p36 = por %p34, %p35
      %p37 = scmp.lt.s32.totalorder %s11, 2
      // Predicated region
      $region9: #{tpu_custom_call.1} parent=5 // pred_check
        %p38 = pneg %p37
      $region10: #{tpu_custom_call.1} parent=5 // pred_check_branch
        %40 = sbr.rel (%p38) target = $region12
      $region11: #{tpu_custom_call.1} parent=5 // pred_region
        %p41 = pneg %p29
        %p42 = pneg %p26
        %s43 = sand.u32 %s20, 1
        %s44 = scalar_lea.sflag [#allocation5], %s43
        %s45 = sand.u32 %s20, 1
        %s46 = smul.addr %s45, 64
        %s47 = scalar_lea.vmem [#allocation4], %s46
        %s48 = smul.u32 2, %s11
        %s49 = sld [smem:[#allocation3]]
        %s50 = sadd.s32 %s49, 1
        %s51 = smul.u32 %s50, 2654435769
        %s52 = smul.u32 %s11, 4096
        %s53 = sadd.s32 %s52, %s51
        %v54 = vlaneseq
        %v55 = vshrl.u32 %v54, 7
        %v56 = vlaneseq
        %v57 = vand.u32 %v56, 127
        %v58 = vadd.s32 %v57, 128
        %v59 = vadd.s32 %v57, 256
        %v60 = vadd.s32 %v57, 384
        %v61 = vshll.u32 %v55, 9
        %v62 = vor.u32 %v61, %v57
        %v63 = vor.u32 %v61, %v58
        %v64 = vor.u32 %v61, %v59
        %v65 = vor.u32 %v61, %v60
        %v66 = vstv %s53
        %v67 = vadd.s32 %v62, %v66
        %v68 = vadd.s32 %v63, %v66
        %v69 = vadd.s32 %v64, %v66
        %v70 = vadd.s32 %v65, %v66
        %v71 = vshrl.u32 %v67, 16
        %v72 = vshrl.u32 %v68, 16
        %v73 = vshrl.u32 %v69, 16
        %v74 = vshrl.u32 %v70, 16
        %v75 = vxor.u32 %v67, %v71
        %v76 = vxor.u32 %v68, %v72
        %v77 = vxor.u32 %v69, %v73
        %v78 = vxor.u32 %v70, %v74
        %v79 = vmul.u32 %v75, 2146121005
        %v80 = vmul.u32 %v76, 2146121005
        %v81 = vmul.u32 %v77, 2146121005
        %v82 = vmul.u32 %v78, 2146121005
        %v83 = vshrl.u32 %v79, 15
        %v84 = vshrl.u32 %v80, 15
        %v85 = vshrl.u32 %v81, 15
        %v86 = vshrl.u32 %v82, 15
        %v87 = vxor.u32 %v79, %v83
        %v88 = vxor.u32 %v80, %v84
        %v89 = vxor.u32 %v81, %v85
        %v90 = vxor.u32 %v82, %v86
        %v91 = vmul.u32 %v87, 2221713035
        %v92 = vmul.u32 %v88, 2221713035
        %v93 = vmul.u32 %v89, 2221713035
        %v94 = vmul.u32 %v90, 2221713035
        %v95 = vshrl.u32 %v91, 16
        %v96 = vshrl.u32 %v92, 16
        %v97 = vshrl.u32 %v93, 16
        %v98 = vshrl.u32 %v94, 16
        %v99 = vxor.u32 %v91, %v95
        %v100 = vxor.u32 %v92, %v96
        %v101 = vxor.u32 %v93, %v97
        %v102 = vxor.u32 %v94, %v98
        %v103 = vshrl.u32 %v99, 16
        %v104 = vshrl.u32 %v100, 16
        %v105 = vshrl.u32 %v101, 16
        %v106 = vshrl.u32 %v102, 16
        %v107 = vshll.u32 %v103, 7
        %v108 = vshll.u32 %v104, 7
        %v109 = vshll.u32 %v105, 7
        %v110 = vshll.u32 %v106, 7
        %v111 = vor.u32 %v107, 1065353216
        %v112 = vor.u32 %v108, 1065353216
        %v113 = vor.u32 %v109, 1065353216
        %v114 = vor.u32 %v110, 1065353216
        %v119 = vsub.f32 2.0, %v111
        %v120 = vsub.f32 2.0, %v112
        %v121 = vsub.f32 2.0, %v113
        %v122 = vsub.f32 2.0, %v114
        %v123 = vand.u32 %v99, 65534
        %v124 = vand.u32 %v100, 65534
        %v125 = vand.u32 %v101, 65534
        %v126 = vand.u32 %v102, 65534
        %v127 = vshll.u32 %v123, 7
        %v128 = vshll.u32 %v124, 7
        %v129 = vshll.u32 %v125, 7
        %v130 = vshll.u32 %v126, 7
        %v131 = vor.u32 %v127, 1065353216
        %v132 = vor.u32 %v128, 1065353216
        %v133 = vor.u32 %v129, 1065353216
        %v134 = vor.u32 %v130, 1065353216
        %v139 = vsub.f32 %v131, 1.0
        %v140 = vsub.f32 %v132, 1.0
        %v141 = vsub.f32 %v133, 1.0
        %v142 = vsub.f32 %v134, 1.0
        %v143 = vand.u32 %v99, 1
        %v144 = vand.u32 %v100, 1
        %v145 = vand.u32 %v101, 1
        %v146 = vand.u32 %v102, 1
        %v147 = vshll.u32 %v143, 31
        %v148 = vshll.u32 %v144, 31
        %v149 = vshll.u32 %v145, 31
        %v150 = vshll.u32 %v146, 31
        %v151 = vor.u32 %v147, 1065353216
        %v152 = vor.u32 %v148, 1065353216
        %v153 = vor.u32 %v149, 1065353216
        %v154 = vor.u32 %v150, 1065353216
        %v159 = vlog2.pop %v119
        %v160 = vmul.f32 %v159, 0.6931472
        %v161 = vlog2.pop %v120
        %v162 = vmul.f32 %v161, 0.6931472
        %v163 = vlog2.pop %v121
        %v164 = vmul.f32 %v163, 0.6931472
        %v165 = vlog2.pop %v122
        %v166 = vmul.f32 %v165, 0.6931472
        %v167 = vmul.f32 %v160, -2.0
        %v168 = vmul.f32 %v162, -2.0
        %v169 = vmul.f32 %v164, -2.0
        %v170 = vmul.f32 %v166, -2.0
        %v171 = vrsqrt.pop %v167
        %v172 = vmul.f32 %v167, %v171
        %vm173 = vcmp.eq.f32.partialorder %v167, inf
        %v174 = vsel %vm173, %v167, %v172
        %vm175 = vcmp.eq.f32.partialorder %v167, 0.0
        %v176 = vand.u32 %v167, 2147483648
        %v177 = vsel %vm175, %v176, %v174
        %v178 = vrsqrt.pop %v168
        %v179 = vmul.f32 %v168, %v178
        %vm180 = vcmp.eq.f32.partialorder %v168, inf
        %v181 = vsel %vm180, %v168, %v179
        %vm182 = vcmp.eq.f32.partialorder %v168, 0.0
        %v183 = vand.u32 %v168, 2147483648
        %v184 = vsel %vm182, %v183, %v181
        %v185 = vrsqrt.pop %v169
        %v186 = vmul.f32 %v169, %v185
        %vm187 = vcmp.eq.f32.partialorder %v169, inf
        %v188 = vsel %vm187, %v169, %v186
        %vm189 = vcmp.eq.f32.partialorder %v169, 0.0
        %v190 = vand.u32 %v169, 2147483648
        %v191 = vsel %vm189, %v190, %v188
        %v192 = vrsqrt.pop %v170
        %v193 = vmul.f32 %v170, %v192
        %vm194 = vcmp.eq.f32.partialorder %v170, inf
        %v195 = vsel %vm194, %v170, %v193
        %vm196 = vcmp.eq.f32.partialorder %v170, 0.0
        %v197 = vand.u32 %v170, 2147483648
        %v198 = vsel %vm196, %v197, %v195
        %v199 = vmul.f32 %v139, 6.2831855
        %v200 = vmul.f32 %v140, 6.2831855
        %v201 = vmul.f32 %v141, 6.2831855
        %v202 = vmul.f32 %v142, 6.2831855
        %v203 = vand.u32 2147483647, %v199
        %vm204 = vcmp.le.f32.partialorder %v203, 0.7853982
        %vm205 = vcmp.lt.s32.totalorder %v199, 0
        %v206 = vand.u32 %v199, 2139095040
        %v207 = vshrl.u32 %v206, 23
        %v208 = vsub.s32 %v207, 127
        %v209 = vand.u32 2147483647, %v199
        %v210 = vand.u32 %v209, 8388607
        %v211 = vor.u32 %v210, 8388608
        %v212 = vsub.s32 0, %v211
        %v213 = vadd.s32 %v208, 1
        %vm214 = vcmp.gt.s32.totalorder %v213, 0
        %v215 = vsel %vm214, %v213, 0
        %v216 = vshrl.u32 %v215, 5
        %v217 = vand.u32 %v215, 31
        %v218 = vsub.s32 32, %v217
        %v219 = vshrl.u32 683565275, %v218
        %v220 = vshll.u32 683565275, %v217
        %v221 = vshrl.u32 2475754826, %v218
        %v222 = vor.u32 %v220, %v221
        %v223 = vshll.u32 2475754826, %v217
        %v224 = vshrl.u32 2131351028, %v218
        %v225 = vor.u32 %v223, %v224
        %v226 = vshll.u32 2131351028, %v217
        %v227 = vshrl.u32 2102212464, %v218
        %v228 = vor.u32 %v226, %v227
        %v229 = vshll.u32 2102212464, %v217
        %v230 = vshrl.u32 920167782, %v218
        %v231 = vor.u32 %v229, %v230
        %v232 = vshll.u32 920167782, %v217
        %v233 = vshrl.u32 1326507024, %v218
        %v234 = vor.u32 %v232, %v233
        %vm235 = vcmp.lt.s32.totalorder %v216, 1
        %vm236 = vcmp.lt.s32.totalorder %v216, 2
        %vm237 = vcmp.lt.s32.totalorder %v216, 3
        %vm238 = vcmp.lt.s32.totalorder %v216, 4
        %v239 = vsel %vm235, %v219, %v222
        %v240 = vsel %vm238, %v228, 2102212464
        %v241 = vsel %vm237, %v225, %v240
        %v242 = vsel %vm236, %v239, %v241
        %v243 = vsel %vm235, %v222, %v225
        %v244 = vsel %vm238, %v231, 920167782
        %v245 = vsel %vm237, %v228, %v244
        %v246 = vsel %vm236, %v243, %v245
        %v247 = vsel %vm235, %v225, %v228
        %v248 = vsel %vm238, %v234, 1326507024
        %v249 = vsel %vm237, %v231, %v248
        %v250 = vsel %vm236, %v247, %v249
        %v251 = vshll.u32 %v211, 8
        %v252 = vmul.u32.u64.compose %v251, %v250
        %v253 = vextract.low.u32 %v252
        %v254 = vextract.high.u32 %v252
        %v255 = vmul.u32.u64.compose %v251, %v246
        %v256 = vextract.low.u32 %v255
        %v257 = vextract.high.u32 %v255
        %v258 = vmul.u32 %v251, %v242
        %v259 = vadd.s32 %v254, %v256
        %vm260 = vc.u32 %v254, %v256
        %v261 = vadd.s32 %v257, 1
        %v262 = vsel %vm260, %v261, %v257
        %v263 = vadd.s32 %v258, %v262
        %v264 = vadd.s32 %v263, 536870912
        %v265 = vshrl.u32 %v264, 30
        %v266 = vshll.u32 %v265, 30
        %v267 = vsub.s32 %v263, %v266
        %vm268 = vcmp.lt.s32.totalorder %v267, 0
        %v269 = vsub.s32 0, %v267
        %v270 = vsel %vm268, %v269, %v267
        %v271 = vclz %v270
        %v272 = vsub.s32 %v271, 2
        %vm273 = vcmp.gt.s32.totalorder 0, %v272
        %v274 = vsel %vm273, 0, %v272
        %v275 = vsub.s32 32, %v274
        %v276 = vshll.u32 %v267, %v274
        %v277 = vshrl.u32 %v259, %v275
        %v278 = vor.u32 %v276, %v277
        %v279 = vsub.s32 4294967266, %v274
        %v280 = vadd.s32 %v279, 127
        %v281 = vshll.u32 %v280, 23
        %v282 = vor.u32 4788187, %v281
        %v283 = vand.u32 2147483647, %v282
        %v285 = vcvt.s32.f32 %v278
        %v286 = vmul.f32 %v285, %v283
        %v287 = vxor.u32 %v286, 2147483648
        %v288 = vsel %vm205, %v287, %v286
        %v289 = vsub.s32 4, %v265
        %v290 = vsel %vm205, %v289, %v265
        %v291 = vsel %vm204, %v199, %v288
        %v292 = vsel %vm204, 0, %v290
        %v293 = vcosq.f32.pop %v291
        %v294 = vsinq.f32.pop %v291
        %vm295 = vweird.f32 %v199
        %v296 = vand.u32 %v292, 3
        %vm297 = vcmp.lt.s32.totalorder %v296, 2
        %vm298 = vcmp.eq.s32.totalorder %v296, 0
        %v299 = vxor.u32 %v294, 2147483648
        %v300 = vsel %vm298, %v293, %v299
        %vm301 = vcmp.eq.s32.totalorder %v296, 2
        %v302 = vxor.u32 %v293, 2147483648
        %v303 = vsel %vm301, %v302, %v294
        %v304 = vsel %vm297, %v300, %v303
        %v305 = vsel %vm295, nan, %v304
        %v306 = vand.u32 2147483647, %v200
        %vm307 = vcmp.le.f32.partialorder %v306, 0.7853982
        %vm308 = vcmp.lt.s32.totalorder %v200, 0
        %v309 = vand.u32 %v200, 2139095040
        %v310 = vshrl.u32 %v309, 23
        %v311 = vsub.s32 %v310, 127
        %v312 = vand.u32 2147483647, %v200
        %v313 = vand.u32 %v312, 8388607
        %v314 = vor.u32 %v313, 8388608
        %v315 = vsub.s32 0, %v314
        %v316 = vadd.s32 %v311, 1
        %vm317 = vcmp.gt.s32.totalorder %v316, 0
        %v318 = vsel %vm317, %v316, 0
        %v319 = vshrl.u32 %v318, 5
        %v320 = vand.u32 %v318, 31
        %v321 = vsub.s32 32, %v320
        %v322 = vshrl.u32 683565275, %v321
        %v323 = vshll.u32 683565275, %v320
        %v324 = vshrl.u32 2475754826, %v321
        %v325 = vor.u32 %v323, %v324
        %v326 = vshll.u32 2475754826, %v320
        %v327 = vshrl.u32 2131351028, %v321
        %v328 = vor.u32 %v326, %v327
        %v329 = vshll.u32 2131351028, %v320
        %v330 = vshrl.u32 2102212464, %v321
        %v331 = vor.u32 %v329, %v330
        %v332 = vshll.u32 2102212464, %v320
        %v333 = vshrl.u32 920167782, %v321
        %v334 = vor.u32 %v332, %v333
        %v335 = vshll.u32 920167782, %v320
        %v336 = vshrl.u32 1326507024, %v321
        %v337 = vor.u32 %v335, %v336
        %vm338 = vcmp.lt.s32.totalorder %v319, 1
        %vm339 = vcmp.lt.s32.totalorder %v319, 2
        %vm340 = vcmp.lt.s32.totalorder %v319, 3
        %vm341 = vcmp.lt.s32.totalorder %v319, 4
        %v342 = vsel %vm338, %v322, %v325
        %v343 = vsel %vm341, %v331, 2102212464
        %v344 = vsel %vm340, %v328, %v343
        %v345 = vsel %vm339, %v342, %v344
        %v346 = vsel %vm338, %v325, %v328
        %v347 = vsel %vm341, %v334, 920167782
        %v348 = vsel %vm340, %v331, %v347
        %v349 = vsel %vm339, %v346, %v348
        %v350 = vsel %vm338, %v328, %v331
        %v351 = vsel %vm341, %v337, 1326507024
        %v352 = vsel %vm340, %v334, %v351
        %v353 = vsel %vm339, %v350, %v352
        %v354 = vshll.u32 %v314, 8
        %v355 = vmul.u32.u64.compose %v354, %v353
        %v356 = vextract.low.u32 %v355
        %v357 = vextract.high.u32 %v355
        %v358 = vmul.u32.u64.compose %v354, %v349
        %v359 = vextract.low.u32 %v358
        %v360 = vextract.high.u32 %v358
        %v361 = vmul.u32 %v354, %v345
        %v362 = vadd.s32 %v357, %v359
        %vm363 = vc.u32 %v357, %v359
        %v364 = vadd.s32 %v360, 1
        %v365 = vsel %vm363, %v364, %v360
        %v366 = vadd.s32 %v361, %v365
        %v367 = vadd.s32 %v366, 536870912
        %v368 = vshrl.u32 %v367, 30
        %v369 = vshll.u32 %v368, 30
        %v370 = vsub.s32 %v366, %v369
        %vm371 = vcmp.lt.s32.totalorder %v370, 0
        %v372 = vsub.s32 0, %v370
        %v373 = vsel %vm371, %v372, %v370
        %v374 = vclz %v373
        %v375 = vsub.s32 %v374, 2
        %vm376 = vcmp.gt.s32.totalorder 0, %v375
        %v377 = vsel %vm376, 0, %v375
        %v378 = vsub.s32 32, %v377
        %v379 = vshll.u32 %v370, %v377
        %v380 = vshrl.u32 %v362, %v378
        %v381 = vor.u32 %v379, %v380
        %v382 = vsub.s32 4294967266, %v377
        %v383 = vadd.s32 %v382, 127
        %v384 = vshll.u32 %v383, 23
        %v385 = vor.u32 4788187, %v384
        %v386 = vand.u32 2147483647, %v385
        %v388 = vcvt.s32.f32 %v381
        %v389 = vmul.f32 %v388, %v386
        %v390 = vxor.u32 %v389, 2147483648
        %v391 = vsel %vm308, %v390, %v389
        %v392 = vsub.s32 4, %v368
        %v393 = vsel %vm308, %v392, %v368
        %v394 = vsel %vm307, %v200, %v391
        %v395 = vsel %vm307, 0, %v393
        %v396 = vcosq.f32.pop %v394
        %v397 = vsinq.f32.pop %v394
        %vm398 = vweird.f32 %v200
        %v399 = vand.u32 %v395, 3
        %vm400 = vcmp.lt.s32.totalorder %v399, 2
        %vm401 = vcmp.eq.s32.totalorder %v399, 0
        %v402 = vxor.u32 %v397, 2147483648
        %v403 = vsel %vm401, %v396, %v402
        %vm404 = vcmp.eq.s32.totalorder %v399, 2
        %v405 = vxor.u32 %v396, 2147483648
        %v406 = vsel %vm404, %v405, %v397
        %v407 = vsel %vm400, %v403, %v406
        %v408 = vsel %vm398, nan, %v407
        %v409 = vand.u32 2147483647, %v201
        %vm410 = vcmp.le.f32.partialorder %v409, 0.7853982
        %vm411 = vcmp.lt.s32.totalorder %v201, 0
        %v412 = vand.u32 %v201, 2139095040
        %v413 = vshrl.u32 %v412, 23
        %v414 = vsub.s32 %v413, 127
        %v415 = vand.u32 2147483647, %v201
        %v416 = vand.u32 %v415, 8388607
        %v417 = vor.u32 %v416, 8388608
        %v418 = vsub.s32 0, %v417
        %v419 = vadd.s32 %v414, 1
        %vm420 = vcmp.gt.s32.totalorder %v419, 0
        %v421 = vsel %vm420, %v419, 0
        %v422 = vshrl.u32 %v421, 5
        %v423 = vand.u32 %v421, 31
        %v424 = vsub.s32 32, %v423
        %v425 = vshrl.u32 683565275, %v424
        %v426 = vshll.u32 683565275, %v423
        %v427 = vshrl.u32 2475754826, %v424
        %v428 = vor.u32 %v426, %v427
        %v429 = vshll.u32 2475754826, %v423
        %v430 = vshrl.u32 2131351028, %v424
        %v431 = vor.u32 %v429, %v430
        %v432 = vshll.u32 2131351028, %v423
        %v433 = vshrl.u32 2102212464, %v424
        %v434 = vor.u32 %v432, %v433
        %v435 = vshll.u32 2102212464, %v423
        %v436 = vshrl.u32 920167782, %v424
        %v437 = vor.u32 %v435, %v436
        %v438 = vshll.u32 920167782, %v423
        %v439 = vshrl.u32 1326507024, %v424
        %v440 = vor.u32 %v438, %v439
        %vm441 = vcmp.lt.s32.totalorder %v422, 1
        %vm442 = vcmp.lt.s32.totalorder %v422, 2
        %vm443 = vcmp.lt.s32.totalorder %v422, 3
        %vm444 = vcmp.lt.s32.totalorder %v422, 4
        %v445 = vsel %vm441, %v425, %v428
        %v446 = vsel %vm444, %v434, 2102212464
        %v447 = vsel %vm443, %v431, %v446
        %v448 = vsel %vm442, %v445, %v447
        %v449 = vsel %vm441, %v428, %v431
        %v450 = vsel %vm444, %v437, 920167782
        %v451 = vsel %vm443, %v434, %v450
        %v452 = vsel %vm442, %v449, %v451
        %v453 = vsel %vm441, %v431, %v434
        %v454 = vsel %vm444, %v440, 1326507024
        %v455 = vsel %vm443, %v437, %v454
        %v456 = vsel %vm442, %v453, %v455
        %v457 = vshll.u32 %v417, 8
        %v458 = vmul.u32.u64.compose %v457, %v456
        %v459 = vextract.low.u32 %v458
        %v460 = vextract.high.u32 %v458
        %v461 = vmul.u32.u64.compose %v457, %v452
        %v462 = vextract.low.u32 %v461
        %v463 = vextract.high.u32 %v461
        %v464 = vmul.u32 %v457, %v448
        %v465 = vadd.s32 %v460, %v462
        %vm466 = vc.u32 %v460, %v462
        %v467 = vadd.s32 %v463, 1
        %v468 = vsel %vm466, %v467, %v463
        %v469 = vadd.s32 %v464, %v468
        %v470 = vadd.s32 %v469, 536870912
        %v471 = vshrl.u32 %v470, 30
        %v472 = vshll.u32 %v471, 30
        %v473 = vsub.s32 %v469, %v472
        %vm474 = vcmp.lt.s32.totalorder %v473, 0
        %v475 = vsub.s32 0, %v473
        %v476 = vsel %vm474, %v475, %v473
        %v477 = vclz %v476
        %v478 = vsub.s32 %v477, 2
        %vm479 = vcmp.gt.s32.totalorder 0, %v478
        %v480 = vsel %vm479, 0, %v478
        %v481 = vsub.s32 32, %v480
        %v482 = vshll.u32 %v473, %v480
        %v483 = vshrl.u32 %v465, %v481
        %v484 = vor.u32 %v482, %v483
        %v485 = vsub.s32 4294967266, %v480
        %v486 = vadd.s32 %v485, 127
        %v487 = vshll.u32 %v486, 23
        %v488 = vor.u32 4788187, %v487
        %v489 = vand.u32 2147483647, %v488
        %v491 = vcvt.s32.f32 %v484
        %v492 = vmul.f32 %v491, %v489
        %v493 = vxor.u32 %v492, 2147483648
        %v494 = vsel %vm411, %v493, %v492
        %v495 = vsub.s32 4, %v471
        %v496 = vsel %vm411, %v495, %v471
        %v497 = vsel %vm410, %v201, %v494
        %v498 = vsel %vm410, 0, %v496
        %v499 = vcosq.f32.pop %v497
        %v500 = vsinq.f32.pop %v497
        %vm501 = vweird.f32 %v201
        %v502 = vand.u32 %v498, 3
        %vm503 = vcmp.lt.s32.totalorder %v502, 2
        %vm504 = vcmp.eq.s32.totalorder %v502, 0
        %v505 = vxor.u32 %v500, 2147483648
        %v506 = vsel %vm504, %v499, %v505
        %vm507 = vcmp.eq.s32.totalorder %v502, 2
        %v508 = vxor.u32 %v499, 2147483648
        %v509 = vsel %vm507, %v508, %v500
        %v510 = vsel %vm503, %v506, %v509
        %v511 = vsel %vm501, nan, %v510
        %v512 = vand.u32 2147483647, %v202
        %vm513 = vcmp.le.f32.partialorder %v512, 0.7853982
        %vm514 = vcmp.lt.s32.totalorder %v202, 0
        %v515 = vand.u32 %v202, 2139095040
        %v516 = vshrl.u32 %v515, 23
        %v517 = vsub.s32 %v516, 127
        %v518 = vand.u32 2147483647, %v202
        %v519 = vand.u32 %v518, 8388607
        %v520 = vor.u32 %v519, 8388608
        %v521 = vsub.s32 0, %v520
        %v522 = vadd.s32 %v517, 1
        %vm523 = vcmp.gt.s32.totalorder %v522, 0
        %v524 = vsel %vm523, %v522, 0
        %v525 = vshrl.u32 %v524, 5
        %v526 = vand.u32 %v524, 31
        %v527 = vsub.s32 32, %v526
        %v528 = vshrl.u32 683565275, %v527
        %v529 = vshll.u32 683565275, %v526
        %v530 = vshrl.u32 2475754826, %v527
        %v531 = vor.u32 %v529, %v530
        %v532 = vshll.u32 2475754826, %v526
        %v533 = vshrl.u32 2131351028, %v527
        %v534 = vor.u32 %v532, %v533
        %v535 = vshll.u32 2131351028, %v526
        %v536 = vshrl.u32 2102212464, %v527
        %v537 = vor.u32 %v535, %v536
        %v538 = vshll.u32 2102212464, %v526
        %v539 = vshrl.u32 920167782, %v527
        %v540 = vor.u32 %v538, %v539
        %v541 = vshll.u32 920167782, %v526
        %v542 = vshrl.u32 1326507024, %v527
        %v543 = vor.u32 %v541, %v542
        %vm544 = vcmp.lt.s32.totalorder %v525, 1
        %vm545 = vcmp.lt.s32.totalorder %v525, 2
        %vm546 = vcmp.lt.s32.totalorder %v525, 3
        %vm547 = vcmp.lt.s32.totalorder %v525, 4
        %v548 = vsel %vm544, %v528, %v531
        %v549 = vsel %vm547, %v537, 2102212464
        %v550 = vsel %vm546, %v534, %v549
        %v551 = vsel %vm545, %v548, %v550
        %v552 = vsel %vm544, %v531, %v534
        %v553 = vsel %vm547, %v540, 920167782
        %v554 = vsel %vm546, %v537, %v553
        %v555 = vsel %vm545, %v552, %v554
        %v556 = vsel %vm544, %v534, %v537
        %v557 = vsel %vm547, %v543, 1326507024
        %v558 = vsel %vm546, %v540, %v557
        %v559 = vsel %vm545, %v556, %v558
        %v560 = vshll.u32 %v520, 8
        %v561 = vmul.u32.u64.compose %v560, %v559
        %v562 = vextract.low.u32 %v561
        %v563 = vextract.high.u32 %v561
        %v564 = vmul.u32.u64.compose %v560, %v555
        %v565 = vextract.low.u32 %v564
        %v566 = vextract.high.u32 %v564
        %v567 = vmul.u32 %v560, %v551
        %v568 = vadd.s32 %v563, %v565
        %vm569 = vc.u32 %v563, %v565
        %v570 = vadd.s32 %v566, 1
        %v571 = vsel %vm569, %v570, %v566
        %v572 = vadd.s32 %v567, %v571
        %v573 = vadd.s32 %v572, 536870912
        %v574 = vshrl.u32 %v573, 30
        %v575 = vshll.u32 %v574, 30
        %v576 = vsub.s32 %v572, %v575
        %vm577 = vcmp.lt.s32.totalorder %v576, 0
        %v578 = vsub.s32 0, %v576
        %v579 = vsel %vm577, %v578, %v576
        %v580 = vclz %v579
        %v581 = vsub.s32 %v580, 2
        %vm582 = vcmp.gt.s32.totalorder 0, %v581
        %v583 = vsel %vm582, 0, %v581
        %v584 = vsub.s32 32, %v583
        %v585 = vshll.u32 %v576, %v583
        %v586 = vshrl.u32 %v568, %v584
        %v587 = vor.u32 %v585, %v586
        %v588 = vsub.s32 4294967266, %v583
        %v589 = vadd.s32 %v588, 127
        %v590 = vshll.u32 %v589, 23
        %v591 = vor.u32 4788187, %v590
        %v592 = vand.u32 2147483647, %v591
        %v594 = vcvt.s32.f32 %v587
        %v595 = vmul.f32 %v594, %v592
        %v596 = vxor.u32 %v595, 2147483648
        %v597 = vsel %vm514, %v596, %v595
        %v598 = vsub.s32 4, %v574
        %v599 = vsel %vm514, %v598, %v574
        %v600 = vsel %vm513, %v202, %v597
        %v601 = vsel %vm513, 0, %v599
        %v602 = vcosq.f32.pop %v600
        %v603 = vsinq.f32.pop %v600
        %vm604 = vweird.f32 %v202
        %v605 = vand.u32 %v601, 3
        %vm606 = vcmp.lt.s32.totalorder %v605, 2
        %vm607 = vcmp.eq.s32.totalorder %v605, 0
        %v608 = vxor.u32 %v603, 2147483648
        %v609 = vsel %vm607, %v602, %v608
        %vm610 = vcmp.eq.s32.totalorder %v605, 2
        %v611 = vxor.u32 %v602, 2147483648
        %v612 = vsel %vm610, %v611, %v603
        %v613 = vsel %vm606, %v609, %v612
        %v614 = vsel %vm604, nan, %v613
        %v615 = vmul.f32 %v305, %v305
        %v616 = vmul.f32 %v408, %v408
        %v617 = vmul.f32 %v511, %v511
        %v618 = vmul.f32 %v614, %v614
        %v619 = vsub.f32 1.0, %v615
        %v620 = vsub.f32 1.0, %v616
        %v621 = vsub.f32 1.0, %v617
        %v622 = vsub.f32 1.0, %v618
        %v623 = vmax.f32 %v619, 0.0
        %v624 = vmax.f32 %v620, 0.0
        %v625 = vmax.f32 %v621, 0.0
        %v626 = vmax.f32 %v622, 0.0
        %v627 = vrsqrt.pop %v623
        %v628 = vmul.f32 %v623, %v627
        %vm629 = vcmp.eq.f32.partialorder %v623, inf
        %v630 = vsel %vm629, %v623, %v628
        %vm631 = vcmp.eq.f32.partialorder %v623, 0.0
        %v632 = vand.u32 %v623, 2147483648
        %v633 = vsel %vm631, %v632, %v630
        %v634 = vrsqrt.pop %v624
        %v635 = vmul.f32 %v624, %v634
        %vm636 = vcmp.eq.f32.partialorder %v624, inf
        %v637 = vsel %vm636, %v624, %v635
        %vm638 = vcmp.eq.f32.partialorder %v624, 0.0
        %v639 = vand.u32 %v624, 2147483648
        %v640 = vsel %vm638, %v639, %v637
        %v641 = vrsqrt.pop %v625
        %v642 = vmul.f32 %v625, %v641
        %vm643 = vcmp.eq.f32.partialorder %v625, inf
        %v644 = vsel %vm643, %v625, %v642
        %vm645 = vcmp.eq.f32.partialorder %v625, 0.0
        %v646 = vand.u32 %v625, 2147483648
        %v647 = vsel %vm645, %v646, %v644
        %v648 = vrsqrt.pop %v626
        %v649 = vmul.f32 %v626, %v648
        %vm650 = vcmp.eq.f32.partialorder %v626, inf
        %v651 = vsel %vm650, %v626, %v649
        %vm652 = vcmp.eq.f32.partialorder %v626, 0.0
        %v653 = vand.u32 %v626, 2147483648
        %v654 = vsel %vm652, %v653, %v651
        %v655 = vmul.f32 %v177, %v305
        %v656 = vmul.f32 %v184, %v408
        %v657 = vmul.f32 %v191, %v511
        %v658 = vmul.f32 %v198, %v614
        %659 = vst [vmem:[%s47] sm:$0xff] %v655
        %660 = vst [vmem:[%s47 + $0x8] sm:$0xff] %v656
        %661 = vst [vmem:[%s47 + $0x10] sm:$0xff] %v657
        %662 = vst [vmem:[%s47 + $0x18] sm:$0xff] %v658
        %v663 = vmul.f32 %v177, %v151
        %v664 = vmul.f32 %v184, %v152
        %v665 = vmul.f32 %v191, %v153
        %v666 = vmul.f32 %v198, %v154
        %v667 = vmul.f32 %v663, %v633
        %v668 = vmul.f32 %v664, %v640
        %v669 = vmul.f32 %v665, %v647
        %v670 = vmul.f32 %v666, %v654
        %671 = vst [vmem:[%s47 + $0x20] sm:$0xff] %v667
        %672 = vst [vmem:[%s47 + $0x28] sm:$0xff] %v668
        %673 = vst [vmem:[%s47 + $0x30] sm:$0xff] %v669
        %674 = vst [vmem:[%s47 + $0x38] sm:$0xff] %v670
        %s675 = sand.u32 %s20, 1
        %s676 = scalar_lea.sflag [#allocation5], %s675
        %s677 = sand.u32 %s20, 1
        %s678 = smul.addr %s677, 64
        %s679 = scalar_lea.vmem [#allocation4], %s678
        // Predicated region
        $region13: #{tpu_custom_call.1} parent=11 // pred_check
          %p680 = pneg %p26
        $region14: #{tpu_custom_call.1} parent=11 // pred_check_branch
          %682 = sbr.rel (%p680) target = $region16
        $region15: #{tpu_custom_call.1} parent=11 // pred_region
          %s683 = smul.u32 2, %s11
          %s685 = ssub.s32 1024, 1024
          %686 = vsyncadd %s676, %s685
          %s687 = smul.addr %s683, 4
          %s688 = smul.addr %s687, 128
          %s689 = scalar_lea.hbm %s1, %s688
          %s690 = sshll.u32 %s679, 4
          %s691 = int_to_ptr.vmem [resolvable:$true] %s690
          %696 = dma.vmem_to_hbm [thread:$0]  %s691, 1024, %s689, %s676, 512, 512, 32
        $region16: #{tpu_custom_call.1} parent=11 // pred_fallthru
          _
      $region12: #{tpu_custom_call.1} parent=5 // pred_fallthru
        _
      %p697 = scmp.le.s32.totalorder 1, %s11
      // Predicated region
      $region17: #{tpu_custom_call.1} parent=5 // pred_check
        %p698 = pneg %p697
      $region18: #{tpu_custom_call.1} parent=5 // pred_check_branch
        %700 = sbr.rel (%p698) target = $region20
      $region19: #{tpu_custom_call.1} parent=5 // pred_region
        %s701 = ssub.s32 %s11, 1
        // Predicated region
        $region21: #{tpu_custom_call.1} parent=19 // pred_check
          %p702 = pneg %p32
        $region22: #{tpu_custom_call.1} parent=19 // pred_check_branch
          %704 = sbr.rel (%p702) target = $region24
        $region23: #{tpu_custom_call.1} parent=19 // pred_region
          %s705 = sand.u32 %s23, 1
          %s706 = scalar_lea.sflag [#allocation5], %s705
          %s707 = sand.u32 %s23, 1
          %s708 = smul.addr %s707, 64
          %s709 = scalar_lea.vmem [#allocation4], %s708
          %710 = dma.done %s706, 1024
        $region24: #{tpu_custom_call.1} parent=19 // pred_fallthru
          _
      $region20: #{tpu_custom_call.1} parent=5 // pred_fallthru
        _
    $region6: #{tpu_custom_call.1} parent=1 // loop_footer
      %s15 = sadd.s32 1, %s11
    $region7: #{tpu_custom_call.1} parent=1 // loop_footer_branch
      %10 = sbr.rel target = $region3
    $region8: #{tpu_custom_call.1} parent=1 // loop_exit
      _
    %711 = vsyncpa [#allocation5], 1
    %s712 = scalar_lea.sflag [#allocation5], 1
    %713 = vsyncpa %s712, 1

</llo_original>
